<compile_context>
chip_gen: v5e
topology: v5e:2x2
jax: 0.10.0
libtpu: 0.0.40
codegen_flags: <defaults>
</compile_context>

<pallas_src>
import functools

import numpy as np
import jax
import jax.numpy as jnp
from jax import lax
from jax.experimental import pallas as pl
from jax.experimental.pallas import tpu as pltpu


# ----------------------------------------------------------------------------
# Fused Pallas kernel: all layers + gating + residual + skip-mix in one call.
# ----------------------------------------------------------------------------
def _fused_wavenet_call(dilations, C, K, B, T):
    BT = B * T
    L = len(dilations)

    def kernel(x_ref, ws_ref, wr_ref, o_ref):
        # x_ref: (1, BT) -- single input channel, batch folded into lanes.
        # Replicate over C sublanes INSIDE the kernel (input DMA is 1 row, not
        # C).  Layer-0 weight columns 1..C-1 are zero-padded, so layer 0 sees
        # exactly the 1-channel input; the broadcast also reproduces PyTorch's
        # (N,C,T) + (N,1,T) residual-add broadcast at layer 0.
        act = jnp.broadcast_to(x_ref[...], (C, BT))            # (C, BT) f32
        ones_row = jnp.ones((1, BT), jnp.float32)               # bias-trick row (hoisted)
        skip = jnp.zeros((1, BT), jnp.float32)                  # fused linear_mix accumulator

        for l in range(L):                                      # static unroll (L small here)
            d = dilations[l]
            # Dilated taps: lane t of tap j holds act[:, t - (K-1-j)*d]
            # (tail-aligned conv) via XLU roll.  Wrapped lanes only affect
            # positions never read by the final slice (w_out <= T - shrink).
            taps = []
            for j in range(K):
                r = (K - 1 - j) * d
                taps.append(pltpu.roll(act, r, 1) if r > 0 else act)
            x_aug = jnp.concatenate(taps + [ones_row], axis=0)  # (K*C+1, BT)

            # ONE MXU matmul = all K taps, both sigm/tanh branches AND both
            # biases (bias column of ws_ref hits the ones row).
            st = jnp.dot(ws_ref[l], x_aug,
                         preferred_element_type=jnp.float32)    # (2C, BT)

            # Gate kept in f32 (see header: v5e has no bf16 EUP; f32 keeps the
            # 2e-3 tolerance on every chip).
            gated = jnp.tanh(st[C:]) * jax.nn.sigmoid(st[:C])   # (C, BT)

            # Residual 1x1 conv (+ b_res) AND this layer's linear_mix skip row
            # in ONE matmul: wr_ref[l] is (C+1, C+1) with
            #   [:C,:C]=w_res, [:C,C]=b_res, [C,:C]=wm_l, [C,C]=b_mix (l==0).
            g_aug = jnp.concatenate([gated, ones_row], axis=0)  # (C+1, BT)
            rs = jnp.dot(wr_ref[l], g_aug,
                         preferred_element_type=jnp.float32)    # (C+1, BT)

            act = rs[:C] + act                                  # residual add (tail-aligned)
            skip = skip + rs[C:C + 1]                           # skip row accumulation

        o_ref[...] = skip                                       # (1, BT) lane-dense store

    flops = L * BT * (2 * (2 * C) * (K * C + 1)
                      + 2 * (C + 1) * (C + 1) + 5 * C + 1)
    transcendentals = L * 2 * C * BT
    bytes_accessed = 4 * (2 * BT + L * (2 * C * (K * C + 1) + (C + 1) * (C + 1)))

    # TODO(synk): when scaling B*T, add a lane-axis grid (left halo of
    # sum(d*(K-1)) lanes, dimension_semantics=("parallel",), weights with a
    # constant index_map so they stay VMEM-resident) to use v7x's second
    # TensorCore and respect its 64 MiB VMEM.
    return pl.pallas_call(
        kernel,
        out_shape=jax.ShapeDtypeStruct((1, BT), jnp.float32),
        cost_estimate=pl.CostEstimate(flops=flops,
                                      transcendentals=transcendentals,
                                      bytes_accessed=bytes_accessed),
    )


# ----------------------------------------------------------------------------
# Host-side (numpy) parameter packing -- runs ONCE, outside the jitted path.
# ----------------------------------------------------------------------------
def pack_params(params, C, K):
    L = len(params["layers"])
    ws = np.zeros((L, 2 * C, K * C + 1), np.float32)     # gate weights + bias col
    wr = np.zeros((L, C + 1, C + 1), np.float32)         # residual + skip row + bias col
    w_mix = np.asarray(params["w_mix"], np.float32)[:, :, 0]   # (1, L*C)
    b_mix = float(np.asarray(params["b_mix"], np.float32)[0])
    for l, p in enumerate(params["layers"]):
        w_s = np.asarray(p["w_sigm"], np.float32)
        w_t = np.asarray(p["w_tanh"], np.float32)
        cin = w_s.shape[1]                               # 1 for layer 0, else C
        for j in range(K):                               # zero-pad unused columns
            ws[l, :C, j * C:j * C + cin] = w_s[:, :, j]
            ws[l, C:, j * C:j * C + cin] = w_t[:, :, j]
        ws[l, :C, K * C] = np.asarray(p["b_sigm"], np.float32)
        ws[l, C:, K * C] = np.asarray(p["b_tanh"], np.float32)
        wr[l, :C, :C] = np.asarray(p["w_res"], np.float32)[:, :, 0]
        wr[l, :C, C] = np.asarray(p["b_res"], np.float32)
        wr[l, C, :C] = w_mix[0, l * C:(l + 1) * C]       # linear_mix block for this layer
    wr[0, C, C] = b_mix                                  # fold b_mix into layer 0's skip row
    return jnp.asarray(ws), jnp.asarray(wr)


# ----------------------------------------------------------------------------
# Forward pass (fused Pallas) and pure-JAX reference.
# ----------------------------------------------------------------------------
@functools.partial(jax.jit, static_argnums=(3, 4, 5, 6))
def wavenet_forward(x, ws, wr, dilations, num_channels, kernel_size, window_size):
    C, K = num_channels, kernel_size
    B, _, T = x.shape
    BT = B * T
    x_row = x[:, 0, :].reshape(1, BT)                    # single row; no C-fold replica
    out_flat = _fused_wavenet_call(dilations, C, K, B, T)(x_row, ws, wr)   # (1, B*T)
    shrink = sum(d * (K - 1) for d in dilations)
    # w_out <= T - shrink by construction: lanes contaminated by roll
    # wrap-around / batch boundaries are never read by this slice.
    w_out = min(window_size, T - shrink)
    return out_flat.reshape(B, T)[:, T - w_out:][:, None, :]


def _conv1d_ref(x, w, b, dilation):
    # x: (B, Cin, T); w: (Cout, Cin, K) (PyTorch layout); b: (Cout,)
    y = lax.conv_general_dilated(
        x, w, window_strides=(1,), padding="VALID",
        rhs_dilation=(dilation,), dimension_numbers=("NCH", "OIH", "NCH"))
    return y + b[None, :, None]


def wavenet_reference(x, params, dilations, window_size):
    out = x
    skips = []
    for d, p in zip(dilations, params["layers"]):
        xin = out
        s = _conv1d_ref(xin, p["w_sigm"], p["b_sigm"], d)
        t = _conv1d_ref(xin, p["w_tanh"], p["b_tanh"], d)
        g = jnp.tanh(t) * jax.nn.sigmoid(s)
        skips.append(g)
        r = _conv1d_ref(g, p["w_res"], p["b_res"], 1)
        out = r + xin[:, :, -r.shape[2]:]
    T_f = out.shape[2]
    cat = jnp.concatenate([sk[:, :, -T_f:] for sk in skips], axis=1)
    o = _conv1d_ref(cat, params["w_mix"], params["b_mix"], 1)
    return o[:, :, -window_size:]


# ----------------------------------------------------------------------------
# Deterministic PyTorch-Conv1d-like init (weights in PyTorch (Cout, Cin, K)).
# ----------------------------------------------------------------------------
def init_params(key, num_channels, dilation_depth, num_repeat, kernel_size):
    dilations = tuple(2 ** d for d in range(dilation_depth)) * num_repeat
    C = num_channels
    layers = []
    for i, _ in enumerate(dilations):
        cin = 1 if i == 0 else C
        key, *ks = jax.random.split(key, 7)
        bound = 1.0 / (cin * kernel_size) ** 0.5
        bres = 1.0 / float(C) ** 0.5
        layers.append(dict(
            w_sigm=jax.random.uniform(ks[0], (C, cin, kernel_size),
                                      jnp.float32, -bound, bound),
            b_sigm=jax.random.uniform(ks[1], (C,), jnp.float32, -bound, bound),
            w_tanh=jax.random.uniform(ks[2], (C, cin, kernel_size),
                                      jnp.float32, -bound, bound),
            b_tanh=jax.random.uniform(ks[3], (C,), jnp.float32, -bound, bound),
            w_res=jax.random.uniform(ks[4], (C, C, 1), jnp.float32, -bres, bres),
            b_res=jax.random.uniform(ks[5], (C,), jnp.float32, -bres, bres),
        ))
    Cm = C * len(dilations)
    key, k1, k2 = jax.random.split(key, 3)
    bm = 1.0 / float(Cm) ** 0.5
    params = dict(
        layers=layers,
        w_mix=jax.random.uniform(k1, (1, Cm, 1), jnp.float32, -bm, bm),
        b_mix=jax.random.uniform(k2, (1,), jnp.float32, -bm, bm),
    )
    return params, dilations


# ----------------------------------------------------------------------------
if __name__ == "__main__":
    num_channels = 8
    dilation_depth = 3
    num_repeat = 2
    kernel_size = 2
    window_size = 32
    B, T = 2, 64          # input is (B, 1, T): WaveNet first conv has in_channels=1

    key = jax.random.PRNGKey(0)
    kp, kx = jax.random.split(key)
    params, dilations = init_params(kp, num_channels, dilation_depth,
                                    num_repeat, kernel_size)
    x = jax.random.normal(kx, (B, 1, T), jnp.float32)

    # Pack parameters ONCE, host-side (hoisted out of the jitted hot path).
    ws, wr = pack_params(params, num_channels, kernel_size)

    out = wavenet_forward(x, ws, wr, dilations, num_channels,
                          kernel_size, window_size)
    out = jax.block_until_ready(out)

    ref = jax.block_until_ready(
        wavenet_reference(x, params, dilations, window_size))
    assert out.shape == ref.shape, (out.shape, ref.shape)
    np.testing.assert_allclose(np.asarray(out), np.asarray(ref),
                               atol=2e-3, rtol=2e-3)
    print("KERNEL_OK")
</pallas_src>

<mosaic_0001>
module attributes {stable_mosaic.version = 11 : i64} {
  func.func @kernel(%arg0: memref<1x128xf32, #tpu.memory_space<vmem>>, %arg1: memref<6x16x17xf32, #tpu.memory_space<vmem>>, %arg2: memref<6x9x9xf32, #tpu.memory_space<vmem>>, %arg3: memref<1x128xf32, #tpu.memory_space<vmem>>) attributes {dimension_semantics = [], scalar_prefetch = 0 : i64, scratch_operands = 0 : i64, tpu.core_type = #tpu.core_type<tc>} {
    %c0 = arith.constant 0 : index
    %c0_0 = arith.constant 0 : index
    %0 = vector.load %arg0[%c0, %c0_0] : memref<1x128xf32, #tpu.memory_space<vmem>>, vector<1x128xf32>
    %1 = vector.shape_cast %0 : vector<1x128xf32> to vector<1x128xf32>
    %2 = vector.broadcast %1 : vector<1x128xf32> to vector<8x128xf32>
    %cst = arith.constant 1.000000e+00 : f32
    %3 = vector.broadcast %cst : f32 to vector<1x128xf32>
    %cst_1 = arith.constant 0.000000e+00 : f32
    %4 = vector.broadcast %cst_1 : f32 to vector<1x128xf32>
    %c1_i32 = arith.constant 1 : i32
    %5 = tpu.dynamic_rotate %2 by %c1_i32 dim 1 : vector<8x128xf32>, i32 -> vector<8x128xf32>
    %6 = tpu.concatenate %5, %2, %3 in 0 : vector<8x128xf32>, vector<8x128xf32>, vector<1x128xf32> -> vector<17x128xf32>
    %c0_2 = arith.constant 0 : index
    %c0_3 = arith.constant 0 : index
    %c0_4 = arith.constant 0 : index
    %7 = vector.load %arg1[%c0_2, %c0_3, %c0_4] : memref<6x16x17xf32, #tpu.memory_space<vmem>>, vector<1x16x17xf32>
    %8 = vector.shape_cast %7 : vector<1x16x17xf32> to vector<16x17xf32>
    %cst_5 = arith.constant dense<0.000000e+00> : vector<16x128xf32>
    %9 = tpu.matmul %8, %6, %cst_5 {dimension_numbers = #tpu.dot_dimension_numbers<[1], [0], [0], [1], [0, 0, 1, 1], [], []>} : vector<16x17xf32>, vector<17x128xf32>, vector<16x128xf32> -> vector<16x128xf32>
    %10 = vector.extract_strided_slice %9 {offsets = [8, 0], sizes = [8, 128], strides = [1, 1]} : vector<16x128xf32> to vector<8x128xf32>
    %11 = math.tanh %10 : vector<8x128xf32>
    %12 = vector.extract_strided_slice %9 {offsets = [0, 0], sizes = [8, 128], strides = [1, 1]} : vector<16x128xf32> to vector<8x128xf32>
    %13 = arith.negf %12 : vector<8x128xf32>
    %14 = math.exp %13 : vector<8x128xf32>
    %cst_6 = arith.constant 1.000000e+00 : f32
    %15 = vector.broadcast %cst_6 : f32 to vector<8x128xf32>
    %16 = arith.addf %15, %14 : vector<8x128xf32>
    %17 = arith.divf %15, %16 : vector<8x128xf32>
    %18 = arith.mulf %11, %17 : vector<8x128xf32>
    %19 = tpu.concatenate %18, %3 in 0 : vector<8x128xf32>, vector<1x128xf32> -> vector<9x128xf32>
    %c0_7 = arith.constant 0 : index
    %c0_8 = arith.constant 0 : index
    %c0_9 = arith.constant 0 : index
    %20 = vector.load %arg2[%c0_7, %c0_8, %c0_9] : memref<6x9x9xf32, #tpu.memory_space<vmem>>, vector<1x9x9xf32>
    %21 = vector.shape_cast %20 : vector<1x9x9xf32> to vector<9x9xf32>
    %cst_10 = arith.constant dense<0.000000e+00> : vector<9x128xf32>
    %22 = tpu.matmul %21, %19, %cst_10 {dimension_numbers = #tpu.dot_dimension_numbers<[1], [0], [0], [1], [0, 0, 1, 1], [], []>} : vector<9x9xf32>, vector<9x128xf32>, vector<9x128xf32> -> vector<9x128xf32>
    %23 = vector.extract_strided_slice %22 {offsets = [0, 0], sizes = [8, 128], strides = [1, 1]} : vector<9x128xf32> to vector<8x128xf32>
    %24 = arith.addf %23, %2 : vector<8x128xf32>
    %25 = vector.extract_strided_slice %22 {offsets = [8, 0], sizes = [1, 128], strides = [1, 1]} : vector<9x128xf32> to vector<1x128xf32>
    %26 = arith.addf %4, %25 : vector<1x128xf32>
    %c2_i32 = arith.constant 2 : i32
    %27 = tpu.dynamic_rotate %24 by %c2_i32 dim 1 : vector<8x128xf32>, i32 -> vector<8x128xf32>
    %28 = tpu.concatenate %27, %24, %3 in 0 : vector<8x128xf32>, vector<8x128xf32>, vector<1x128xf32> -> vector<17x128xf32>
    %c1 = arith.constant 1 : index
    %c0_11 = arith.constant 0 : index
    %c0_12 = arith.constant 0 : index
    %29 = vector.load %arg1[%c1, %c0_11, %c0_12] : memref<6x16x17xf32, #tpu.memory_space<vmem>>, vector<1x16x17xf32>
    %30 = vector.shape_cast %29 : vector<1x16x17xf32> to vector<16x17xf32>
    %cst_13 = arith.constant dense<0.000000e+00> : vector<16x128xf32>
    %31 = tpu.matmul %30, %28, %cst_13 {dimension_numbers = #tpu.dot_dimension_numbers<[1], [0], [0], [1], [0, 0, 1, 1], [], []>} : vector<16x17xf32>, vector<17x128xf32>, vector<16x128xf32> -> vector<16x128xf32>
    %32 = vector.extract_strided_slice %31 {offsets = [8, 0], sizes = [8, 128], strides = [1, 1]} : vector<16x128xf32> to vector<8x128xf32>
    %33 = math.tanh %32 : vector<8x128xf32>
    %34 = vector.extract_strided_slice %31 {offsets = [0, 0], sizes = [8, 128], strides = [1, 1]} : vector<16x128xf32> to vector<8x128xf32>
    %35 = arith.negf %34 : vector<8x128xf32>
    %36 = math.exp %35 : vector<8x128xf32>
    %cst_14 = arith.constant 1.000000e+00 : f32
    %37 = vector.broadcast %cst_14 : f32 to vector<8x128xf32>
    %38 = arith.addf %37, %36 : vector<8x128xf32>
    %39 = arith.divf %37, %38 : vector<8x128xf32>
    %40 = arith.mulf %33, %39 : vector<8x128xf32>
    %41 = tpu.concatenate %40, %3 in 0 : vector<8x128xf32>, vector<1x128xf32> -> vector<9x128xf32>
    %c1_15 = arith.constant 1 : index
    %c0_16 = arith.constant 0 : index
    %c0_17 = arith.constant 0 : index
    %42 = vector.load %arg2[%c1_15, %c0_16, %c0_17] : memref<6x9x9xf32, #tpu.memory_space<vmem>>, vector<1x9x9xf32>
    %43 = vector.shape_cast %42 : vector<1x9x9xf32> to vector<9x9xf32>
    %cst_18 = arith.constant dense<0.000000e+00> : vector<9x128xf32>
    %44 = tpu.matmul %43, %41, %cst_18 {dimension_numbers = #tpu.dot_dimension_numbers<[1], [0], [0], [1], [0, 0, 1, 1], [], []>} : vector<9x9xf32>, vector<9x128xf32>, vector<9x128xf32> -> vector<9x128xf32>
    %45 = vector.extract_strided_slice %44 {offsets = [0, 0], sizes = [8, 128], strides = [1, 1]} : vector<9x128xf32> to vector<8x128xf32>
    %46 = arith.addf %45, %24 : vector<8x128xf32>
    %47 = vector.extract_strided_slice %44 {offsets = [8, 0], sizes = [1, 128], strides = [1, 1]} : vector<9x128xf32> to vector<1x128xf32>
    %48 = arith.addf %26, %47 : vector<1x128xf32>
    %c4_i32 = arith.constant 4 : i32
    %49 = tpu.dynamic_rotate %46 by %c4_i32 dim 1 : vector<8x128xf32>, i32 -> vector<8x128xf32>
    %50 = tpu.concatenate %49, %46, %3 in 0 : vector<8x128xf32>, vector<8x128xf32>, vector<1x128xf32> -> vector<17x128xf32>
    %c2 = arith.constant 2 : index
    %c0_19 = arith.constant 0 : index
    %c0_20 = arith.constant 0 : index
    %51 = vector.load %arg1[%c2, %c0_19, %c0_20] : memref<6x16x17xf32, #tpu.memory_space<vmem>>, vector<1x16x17xf32>
    %52 = vector.shape_cast %51 : vector<1x16x17xf32> to vector<16x17xf32>
    %cst_21 = arith.constant dense<0.000000e+00> : vector<16x128xf32>
    %53 = tpu.matmul %52, %50, %cst_21 {dimension_numbers = #tpu.dot_dimension_numbers<[1], [0], [0], [1], [0, 0, 1, 1], [], []>} : vector<16x17xf32>, vector<17x128xf32>, vector<16x128xf32> -> vector<16x128xf32>
    %54 = vector.extract_strided_slice %53 {offsets = [8, 0], sizes = [8, 128], strides = [1, 1]} : vector<16x128xf32> to vector<8x128xf32>
    %55 = math.tanh %54 : vector<8x128xf32>
    %56 = vector.extract_strided_slice %53 {offsets = [0, 0], sizes = [8, 128], strides = [1, 1]} : vector<16x128xf32> to vector<8x128xf32>
    %57 = arith.negf %56 : vector<8x128xf32>
    %58 = math.exp %57 : vector<8x128xf32>
    %cst_22 = arith.constant 1.000000e+00 : f32
    %59 = vector.broadcast %cst_22 : f32 to vector<8x128xf32>
    %60 = arith.addf %59, %58 : vector<8x128xf32>
    %61 = arith.divf %59, %60 : vector<8x128xf32>
    %62 = arith.mulf %55, %61 : vector<8x128xf32>
    %63 = tpu.concatenate %62, %3 in 0 : vector<8x128xf32>, vector<1x128xf32> -> vector<9x128xf32>
    %c2_23 = arith.constant 2 : index
    %c0_24 = arith.constant 0 : index
    %c0_25 = arith.constant 0 : index
    %64 = vector.load %arg2[%c2_23, %c0_24, %c0_25] : memref<6x9x9xf32, #tpu.memory_space<vmem>>, vector<1x9x9xf32>
    %65 = vector.shape_cast %64 : vector<1x9x9xf32> to vector<9x9xf32>
    %cst_26 = arith.constant dense<0.000000e+00> : vector<9x128xf32>
    %66 = tpu.matmul %65, %63, %cst_26 {dimension_numbers = #tpu.dot_dimension_numbers<[1], [0], [0], [1], [0, 0, 1, 1], [], []>} : vector<9x9xf32>, vector<9x128xf32>, vector<9x128xf32> -> vector<9x128xf32>
    %67 = vector.extract_strided_slice %66 {offsets = [0, 0], sizes = [8, 128], strides = [1, 1]} : vector<9x128xf32> to vector<8x128xf32>
    %68 = arith.addf %67, %46 : vector<8x128xf32>
    %69 = vector.extract_strided_slice %66 {offsets = [8, 0], sizes = [1, 128], strides = [1, 1]} : vector<9x128xf32> to vector<1x128xf32>
    %70 = arith.addf %48, %69 : vector<1x128xf32>
    %c1_i32_27 = arith.constant 1 : i32
    %71 = tpu.dynamic_rotate %68 by %c1_i32_27 dim 1 : vector<8x128xf32>, i32 -> vector<8x128xf32>
    %72 = tpu.concatenate %71, %68, %3 in 0 : vector<8x128xf32>, vector<8x128xf32>, vector<1x128xf32> -> vector<17x128xf32>
    %c3 = arith.constant 3 : index
    %c0_28 = arith.constant 0 : index
    %c0_29 = arith.constant 0 : index
    %73 = vector.load %arg1[%c3, %c0_28, %c0_29] : memref<6x16x17xf32, #tpu.memory_space<vmem>>, vector<1x16x17xf32>
    %74 = vector.shape_cast %73 : vector<1x16x17xf32> to vector<16x17xf32>
    %cst_30 = arith.constant dense<0.000000e+00> : vector<16x128xf32>
    %75 = tpu.matmul %74, %72, %cst_30 {dimension_numbers = #tpu.dot_dimension_numbers<[1], [0], [0], [1], [0, 0, 1, 1], [], []>} : vector<16x17xf32>, vector<17x128xf32>, vector<16x128xf32> -> vector<16x128xf32>
    %76 = vector.extract_strided_slice %75 {offsets = [8, 0], sizes = [8, 128], strides = [1, 1]} : vector<16x128xf32> to vector<8x128xf32>
    %77 = math.tanh %76 : vector<8x128xf32>
    %78 = vector.extract_strided_slice %75 {offsets = [0, 0], sizes = [8, 128], strides = [1, 1]} : vector<16x128xf32> to vector<8x128xf32>
    %79 = arith.negf %78 : vector<8x128xf32>
    %80 = math.exp %79 : vector<8x128xf32>
    %cst_31 = arith.constant 1.000000e+00 : f32
    %81 = vector.broadcast %cst_31 : f32 to vector<8x128xf32>
    %82 = arith.addf %81, %80 : vector<8x128xf32>
    %83 = arith.divf %81, %82 : vector<8x128xf32>
    %84 = arith.mulf %77, %83 : vector<8x128xf32>
    %85 = tpu.concatenate %84, %3 in 0 : vector<8x128xf32>, vector<1x128xf32> -> vector<9x128xf32>
    %c3_32 = arith.constant 3 : index
    %c0_33 = arith.constant 0 : index
    %c0_34 = arith.constant 0 : index
    %86 = vector.load %arg2[%c3_32, %c0_33, %c0_34] : memref<6x9x9xf32, #tpu.memory_space<vmem>>, vector<1x9x9xf32>
    %87 = vector.shape_cast %86 : vector<1x9x9xf32> to vector<9x9xf32>
    %cst_35 = arith.constant dense<0.000000e+00> : vector<9x128xf32>
    %88 = tpu.matmul %87, %85, %cst_35 {dimension_numbers = #tpu.dot_dimension_numbers<[1], [0], [0], [1], [0, 0, 1, 1], [], []>} : vector<9x9xf32>, vector<9x128xf32>, vector<9x128xf32> -> vector<9x128xf32>
    %89 = vector.extract_strided_slice %88 {offsets = [0, 0], sizes = [8, 128], strides = [1, 1]} : vector<9x128xf32> to vector<8x128xf32>
    %90 = arith.addf %89, %68 : vector<8x128xf32>
    %91 = vector.extract_strided_slice %88 {offsets = [8, 0], sizes = [1, 128], strides = [1, 1]} : vector<9x128xf32> to vector<1x128xf32>
    %92 = arith.addf %70, %91 : vector<1x128xf32>
    %c2_i32_36 = arith.constant 2 : i32
    %93 = tpu.dynamic_rotate %90 by %c2_i32_36 dim 1 : vector<8x128xf32>, i32 -> vector<8x128xf32>
    %94 = tpu.concatenate %93, %90, %3 in 0 : vector<8x128xf32>, vector<8x128xf32>, vector<1x128xf32> -> vector<17x128xf32>
    %c4 = arith.constant 4 : index
    %c0_37 = arith.constant 0 : index
    %c0_38 = arith.constant 0 : index
    %95 = vector.load %arg1[%c4, %c0_37, %c0_38] : memref<6x16x17xf32, #tpu.memory_space<vmem>>, vector<1x16x17xf32>
    %96 = vector.shape_cast %95 : vector<1x16x17xf32> to vector<16x17xf32>
    %cst_39 = arith.constant dense<0.000000e+00> : vector<16x128xf32>
    %97 = tpu.matmul %96, %94, %cst_39 {dimension_numbers = #tpu.dot_dimension_numbers<[1], [0], [0], [1], [0, 0, 1, 1], [], []>} : vector<16x17xf32>, vector<17x128xf32>, vector<16x128xf32> -> vector<16x128xf32>
    %98 = vector.extract_strided_slice %97 {offsets = [8, 0], sizes = [8, 128], strides = [1, 1]} : vector<16x128xf32> to vector<8x128xf32>
    %99 = math.tanh %98 : vector<8x128xf32>
    %100 = vector.extract_strided_slice %97 {offsets = [0, 0], sizes = [8, 128], strides = [1, 1]} : vector<16x128xf32> to vector<8x128xf32>
    %101 = arith.negf %100 : vector<8x128xf32>
    %102 = math.exp %101 : vector<8x128xf32>
    %cst_40 = arith.constant 1.000000e+00 : f32
    %103 = vector.broadcast %cst_40 : f32 to vector<8x128xf32>
    %104 = arith.addf %103, %102 : vector<8x128xf32>
    %105 = arith.divf %103, %104 : vector<8x128xf32>
    %106 = arith.mulf %99, %105 : vector<8x128xf32>
    %107 = tpu.concatenate %106, %3 in 0 : vector<8x128xf32>, vector<1x128xf32> -> vector<9x128xf32>
    %c4_41 = arith.constant 4 : index
    %c0_42 = arith.constant 0 : index
    %c0_43 = arith.constant 0 : index
    %108 = vector.load %arg2[%c4_41, %c0_42, %c0_43] : memref<6x9x9xf32, #tpu.memory_space<vmem>>, vector<1x9x9xf32>
    %109 = vector.shape_cast %108 : vector<1x9x9xf32> to vector<9x9xf32>
    %cst_44 = arith.constant dense<0.000000e+00> : vector<9x128xf32>
    %110 = tpu.matmul %109, %107, %cst_44 {dimension_numbers = #tpu.dot_dimension_numbers<[1], [0], [0], [1], [0, 0, 1, 1], [], []>} : vector<9x9xf32>, vector<9x128xf32>, vector<9x128xf32> -> vector<9x128xf32>
    %111 = vector.extract_strided_slice %110 {offsets = [0, 0], sizes = [8, 128], strides = [1, 1]} : vector<9x128xf32> to vector<8x128xf32>
    %112 = arith.addf %111, %90 : vector<8x128xf32>
    %113 = vector.extract_strided_slice %110 {offsets = [8, 0], sizes = [1, 128], strides = [1, 1]} : vector<9x128xf32> to vector<1x128xf32>
    %114 = arith.addf %92, %113 : vector<1x128xf32>
    %c4_i32_45 = arith.constant 4 : i32
    %115 = tpu.dynamic_rotate %112 by %c4_i32_45 dim 1 : vector<8x128xf32>, i32 -> vector<8x128xf32>
    %116 = tpu.concatenate %115, %112, %3 in 0 : vector<8x128xf32>, vector<8x128xf32>, vector<1x128xf32> -> vector<17x128xf32>
    %c5 = arith.constant 5 : index
    %c0_46 = arith.constant 0 : index
    %c0_47 = arith.constant 0 : index
    %117 = vector.load %arg1[%c5, %c0_46, %c0_47] : memref<6x16x17xf32, #tpu.memory_space<vmem>>, vector<1x16x17xf32>
    %118 = vector.shape_cast %117 : vector<1x16x17xf32> to vector<16x17xf32>
    %cst_48 = arith.constant dense<0.000000e+00> : vector<16x128xf32>
    %119 = tpu.matmul %118, %116, %cst_48 {dimension_numbers = #tpu.dot_dimension_numbers<[1], [0], [0], [1], [0, 0, 1, 1], [], []>} : vector<16x17xf32>, vector<17x128xf32>, vector<16x128xf32> -> vector<16x128xf32>
    %120 = vector.extract_strided_slice %119 {offsets = [8, 0], sizes = [8, 128], strides = [1, 1]} : vector<16x128xf32> to vector<8x128xf32>
    %121 = math.tanh %120 : vector<8x128xf32>
    %122 = vector.extract_strided_slice %119 {offsets = [0, 0], sizes = [8, 128], strides = [1, 1]} : vector<16x128xf32> to vector<8x128xf32>
    %123 = arith.negf %122 : vector<8x128xf32>
    %124 = math.exp %123 : vector<8x128xf32>
    %cst_49 = arith.constant 1.000000e+00 : f32
    %125 = vector.broadcast %cst_49 : f32 to vector<8x128xf32>
    %126 = arith.addf %125, %124 : vector<8x128xf32>
    %127 = arith.divf %125, %126 : vector<8x128xf32>
    %128 = arith.mulf %121, %127 : vector<8x128xf32>
    %129 = tpu.concatenate %128, %3 in 0 : vector<8x128xf32>, vector<1x128xf32> -> vector<9x128xf32>
    %c5_50 = arith.constant 5 : index
    %c0_51 = arith.constant 0 : index
    %c0_52 = arith.constant 0 : index
    %130 = vector.load %arg2[%c5_50, %c0_51, %c0_52] : memref<6x9x9xf32, #tpu.memory_space<vmem>>, vector<1x9x9xf32>
    %131 = vector.shape_cast %130 : vector<1x9x9xf32> to vector<9x9xf32>
    %cst_53 = arith.constant dense<0.000000e+00> : vector<9x128xf32>
    %132 = tpu.matmul %131, %129, %cst_53 {dimension_numbers = #tpu.dot_dimension_numbers<[1], [0], [0], [1], [0, 0, 1, 1], [], []>} : vector<9x9xf32>, vector<9x128xf32>, vector<9x128xf32> -> vector<9x128xf32>
    %133 = vector.extract_strided_slice %132 {offsets = [8, 0], sizes = [1, 128], strides = [1, 1]} : vector<9x128xf32> to vector<1x128xf32>
    %134 = arith.addf %114, %133 : vector<1x128xf32>
    %c0_54 = arith.constant 0 : index
    %c0_55 = arith.constant 0 : index
    %135 = vector.load %arg3[%c0_54, %c0_55] : memref<1x128xf32, #tpu.memory_space<vmem>>, vector<1x128xf32>
    tpu.vector_store %arg3[%c0_54, %c0_55], %134 {strides = array<i32>} : memref<1x128xf32, #tpu.memory_space<vmem>>, vector<1x128xf32>,
    return
  }
}

</mosaic_0001>

<llo_original>
// kernel: squeeze.1
$region0: #{squeeze.1}
  %s0 = inlined_call_operand.vmem [shape: f32[2,64], index: 0, kind: input, shape index: {}]
  %s1 = inlined_call_operand.vmem [shape: f32[1,128], index: 1, kind: output, shape index: {}]
  $region1: #{squeeze.1} parent=0
    #allocation0 [shape = 'u8[4096]{0}', space=vmem, size = 0x1000, scoped, tag = 'scoped mem for output reshape']
    #allocation1 [shape = 'u8[4096]{0}', space=vmem, size = 0x1000, scoped, tag = 'scoped mem for input reshape']
    %s3 = ssub.s32 4, 1
    %v4 = vld [vmem:[%s0] sm:%s3]
    %5 = vst [vmem:[#allocation1] sm:%s3] %v4
    %v6 = vld [vmem:[#allocation1] sm:$0x1]
    %vm7 = vcmask 523264
    %8 = vst.msk [vmem:[#allocation0] sm:$0x1] %vm7, %v6
    %s9 = scalar_lea.vmem [#allocation1], 1
    %v10 = vld [vmem:[%s9] sm:$0x1]
    %11 = vrot.lane.b32.xlu0 %v10, 64
    %v12 = vpop.permute.xlu0 %11
    %vm13 = vcmask 1048064
    %14 = vst.msk [vmem:[#allocation0] sm:$0x1] %vm13, %v12
    %s16 = ssub.s32 2, 1
    %v17 = vld [vmem:[#allocation0] sm:%s16]
    %s19 = ssub.s32 2, 1
    %20 = vst [vmem:[%s1] sm:%s19] %v17

// kernel: wavenet_forward.1
$region0: #{wavenet_forward.1}
  #allocation0 [shape = 'u32[]', space=smem, size = 0x4, offset = 0x4, fixed_abs, tag = 'smem constant byte address 0x4 - core index']
  #allocation1 [shape = 'u32[72,128]{1,0:T(1,128)}', space=vmem, size = 0x9000, scoped, tag = 'internal scratch']
  %s0 = inlined_call_operand.vmem [shape: f32[1,128], index: 0, kind: input, shape index: {}]
  %s1 = inlined_call_operand.vmem [shape: f32[6,16,17], index: 1, kind: input, shape index: {}]
  %s2 = inlined_call_operand.vmem [shape: f32[6,9,9], index: 2, kind: input, shape index: {}]
  %s3 = inlined_call_operand.vmem [shape: f32[1,128], index: 3, kind: output, shape index: {}]
  %s4 = sld [smem:[#allocation0]]
  $region22: #{wavenet_forward.1} parent=0
    _
  %s6 = ssub.s32 1, %s4
  %s7 = scalar_select 0, %s6, %s4
  // Predicated region
  $region2: #{wavenet_forward.1} parent=0 // pred_check
    _
  $region3: #{wavenet_forward.1} parent=0 // pred_check_branch
    %9 = sbr.rel (0) target = $region5
  $region4: #{wavenet_forward.1} parent=0 // pred_region
    _
  $region5: #{wavenet_forward.1} parent=0 // pred_fallthru
    _
  // Predicated region
  $region6: #{wavenet_forward.1} parent=0 // pred_check
    _
  $region7: #{wavenet_forward.1} parent=0 // pred_check_branch
    %11 = sbr.rel (0) target = $region9
  $region8: #{wavenet_forward.1} parent=0 // pred_region
    _
  $region9: #{wavenet_forward.1} parent=0 // pred_fallthru
    _
  // Predicated region
  $region10: #{wavenet_forward.1} parent=0 // pred_check
    _
  $region11: #{wavenet_forward.1} parent=0 // pred_check_branch
    %13 = sbr.rel (0) target = $region13
  $region12: #{wavenet_forward.1} parent=0 // pred_region
    _
  $region13: #{wavenet_forward.1} parent=0 // pred_fallthru
    _
  %v14 = vld [vmem:[%s0] sm:$0x1]
  %v16 = vperm.slane %v14, 0
  %18 = vrot.lane.b32.xlu0 %v16, 1
  %v19 = vpop.permute.xlu0 %18
  %v20 = vld [vmem:[%s1] sm:$0xff]
  %v21 = vld [vmem:[%s1 + $0x8] sm:$0xff]
  %vm22 = vcmask 138240
  %v24 = vsel %vm22, %v20, 0
  %v27 = vsel %vm22, %v21, 0
  %vm29 = vcmask 1040384
  %v31 = vsel %vm29, 1.0, 0
  %33 = vmatpush.msra.mxu0 0.0
  %34 = vmatpush.msra.mxu0 0.0
  %35 = vmatpush.msra.mxu0 0.0
  %36 = vmatpush.msra.mxu0 0.0
  %37 = vmatpush.msra.mxu0 0.0
  %38 = vmatpush.msra.mxu0 0.0
  %39 = vmatpush.msra.mxu0 0.0
  %40 = vmatpush.msra.mxu0 0.0
  %41 = vmatpush.msra.mxu0 0.0
  %42 = vmatpush.msra.mxu0 0.0
  %43 = vmatpush.msra.mxu0 0.0
  %44 = vmatpush.msra.mxu0 0.0
  %45 = vmatpush.msra.mxu0 0.0
  %46 = vmatpush.msra.mxu0 %v31
  %47 = vmatpush.msra.mxu0 %v16
  %48 = vmatpush.msra.mxu0 %v19
  %49 = vmatmul.f32.gmra.mxu0 %v24
  %v50 = vpop.f32.mrf.mxu0
  %v51 = vadd.f32 0.0, %v50
  %52 = vmatmul.f32.gmra.mxu0 %v27
  %v53 = vpop.f32.mrf.mxu0
  %v54 = vadd.f32 0.0, %v53
  %55 = vdwg.mxu0
  %v56 = vtanh.pop %v54
  %v57 = vxor.u32 %v51, 2147483648
  %v58 = vmul.f32 %v57, 1.442695
  %v59 = vpow.pop %v58
  %v60 = vadd.f32 %v59, 1.0
  %v61 = vrcp.pop %v60
  %v62 = vmul.f32 %v60, %v61
  %v63 = vsub.f32 1.0, %v62
  %v64 = vmul.f32 %v61, %v63
  %v65 = vadd.f32 %v61, %v64
  %vm66 = vweird.f32 %v60
  %vm67 = vweird.f32 %v61
  %vm68 = vmor %vm66, %vm67
  %v69 = vsel %vm68, %v61, %v65
  %v70 = vand.u32 2147483647, %v60
  %vm71 = vcmp.eq.f32.partialorder %v70, 8.507059e+37
  %v72 = vand.u32 %v60, 2147483648
  %v73 = vor.u32 1.1754944e-38, %v72
  %v74 = vsel %vm71, %v73, %v69
  %v75 = vmul.f32 1.0, %v74
  %v76 = vmul.f32 %v56, %v75
  %v77 = vld [vmem:[%s2] sm:$0xff]
  %v78 = vld [vmem:[%s2 + $0x8] sm:$0x1]
  %vm79 = vcmask 72704
  %v81 = vsel %vm79, %v77, 0
  %v84 = vsel %vm79, %v78, 0
  %86 = vmatpush.msra.mxu0 0.0
  %87 = vmatpush.msra.mxu0 0.0
  %88 = vmatpush.msra.mxu0 0.0
  %89 = vmatpush.msra.mxu0 0.0
  %90 = vmatpush.msra.mxu0 0.0
  %91 = vmatpush.msra.mxu0 0.0
  %92 = vmatpush.msra.mxu0 0.0
  %93 = vmatpush.msra.mxu0 0.0
  %94 = vmatpush.msra.mxu0 0.0
  %95 = vmatpush.msra.mxu0 0.0
  %96 = vmatpush.msra.mxu0 0.0
  %97 = vmatpush.msra.mxu0 0.0
  %98 = vmatpush.msra.mxu0 0.0
  %99 = vmatpush.msra.mxu0 0.0
  %100 = vmatpush.msra.mxu0 %v31
  %101 = vmatpush.msra.mxu0 %v76
  %102 = vmatmul.f32.gmra.mxu0 %v81
  %v103 = vpop.f32.mrf.mxu0
  %v104 = vadd.f32 0.0, %v103
  %105 = vmatmul.f32.gmra.mxu0 %v84
  %v106 = vpop.f32.mrf.mxu0
  %v107 = vadd.f32 0.0, %v106
  %108 = vdwg.mxu0
  %v109 = vadd.f32 %v104, %v16
  %v110 = vadd.f32 %v107, 0.0
  %111 = vrot.lane.b32.xlu0 %v109, 2
  %v112 = vpop.permute.xlu0 %111
  %s113 = scalar_lea.vmem %s1, 16
  %v114 = vld [vmem:[%s113] sm:$0xff]
  %v115 = vld [vmem:[%s113 + $0x8] sm:$0xff]
  %v117 = vsel %vm22, %v114, 0
  %v120 = vsel %vm22, %v115, 0
  %122 = vmatpush.msra.mxu0 0.0
  %123 = vmatpush.msra.mxu0 0.0
  %124 = vmatpush.msra.mxu0 0.0
  %125 = vmatpush.msra.mxu0 0.0
  %126 = vmatpush.msra.mxu0 0.0
  %127 = vmatpush.msra.mxu0 0.0
  %128 = vmatpush.msra.mxu0 0.0
  %129 = vmatpush.msra.mxu0 0.0
  %130 = vmatpush.msra.mxu0 0.0
  %131 = vmatpush.msra.mxu0 0.0
  %132 = vmatpush.msra.mxu0 0.0
  %133 = vmatpush.msra.mxu0 0.0
  %134 = vmatpush.msra.mxu0 0.0
  %135 = vmatpush.msra.mxu0 %v31
  %136 = vmatpush.msra.mxu0 %v109
  %137 = vmatpush.msra.mxu0 %v112
  %138 = vmatmul.f32.gmra.mxu0 %v117
  %v139 = vpop.f32.mrf.mxu0
  %v140 = vadd.f32 0.0, %v139
  %141 = vmatmul.f32.gmra.mxu0 %v120
  %v142 = vpop.f32.mrf.mxu0
  %v143 = vadd.f32 0.0, %v142
  %144 = vdwg.mxu0
  %v145 = vtanh.pop %v143
  %v146 = vxor.u32 %v140, 2147483648
  %v147 = vmul.f32 %v146, 1.442695
  %v148 = vpow.pop %v147
  %v149 = vadd.f32 %v148, 1.0
  %v150 = vrcp.pop %v149
  %v151 = vmul.f32 %v149, %v150
  %v152 = vsub.f32 1.0, %v151
  %v153 = vmul.f32 %v150, %v152
  %v154 = vadd.f32 %v150, %v153
  %vm155 = vweird.f32 %v149
  %vm156 = vweird.f32 %v150
  %vm157 = vmor %vm155, %vm156
  %v158 = vsel %vm157, %v150, %v154
  %v159 = vand.u32 2147483647, %v149
  %vm160 = vcmp.eq.f32.partialorder %v159, 8.507059e+37
  %v161 = vand.u32 %v149, 2147483648
  %v162 = vor.u32 1.1754944e-38, %v161
  %v163 = vsel %vm160, %v162, %v158
  %v164 = vmul.f32 1.0, %v163
  %v165 = vmul.f32 %v145, %v164
  %s166 = scalar_lea.vmem %s2, 16
  %v167 = vld [vmem:[%s166] sm:$0xff]
  %v168 = vld [vmem:[%s166 + $0x8] sm:$0x1]
  %v170 = vsel %vm79, %v167, 0
  %v173 = vsel %vm79, %v168, 0
  %175 = vmatpush.msra.mxu0 0.0
  %176 = vmatpush.msra.mxu0 0.0
  %177 = vmatpush.msra.mxu0 0.0
  %178 = vmatpush.msra.mxu0 0.0
  %179 = vmatpush.msra.mxu0 0.0
  %180 = vmatpush.msra.mxu0 0.0
  %181 = vmatpush.msra.mxu0 0.0
  %182 = vmatpush.msra.mxu0 0.0
  %183 = vmatpush.msra.mxu0 0.0
  %184 = vmatpush.msra.mxu0 0.0
  %185 = vmatpush.msra.mxu0 0.0
  %186 = vmatpush.msra.mxu0 0.0
  %187 = vmatpush.msra.mxu0 0.0
  %188 = vmatpush.msra.mxu0 0.0
  %189 = vmatpush.msra.mxu0 %v31
  %190 = vmatpush.msra.mxu0 %v165
  %191 = vmatmul.f32.gmra.mxu0 %v170
  %v192 = vpop.f32.mrf.mxu0
  %v193 = vadd.f32 0.0, %v192
  %194 = vmatmul.f32.gmra.mxu0 %v173
  %v195 = vpop.f32.mrf.mxu0
  %v196 = vadd.f32 0.0, %v195
  %197 = vdwg.mxu0
  %v198 = vadd.f32 %v193, %v109
  %v199 = vadd.f32 %v110, %v196
  %200 = vrot.lane.b32.xlu0 %v198, 4
  %v201 = vpop.permute.xlu0 %200
  %s202 = scalar_lea.vmem %s1, 32
  %v203 = vld [vmem:[%s202] sm:$0xff]
  %v204 = vld [vmem:[%s202 + $0x8] sm:$0xff]
  %v206 = vsel %vm22, %v203, 0
  %v209 = vsel %vm22, %v204, 0
  %211 = vmatpush.msra.mxu0 0.0
  %212 = vmatpush.msra.mxu0 0.0
  %213 = vmatpush.msra.mxu0 0.0
  %214 = vmatpush.msra.mxu0 0.0
  %215 = vmatpush.msra.mxu0 0.0
  %216 = vmatpush.msra.mxu0 0.0
  %217 = vmatpush.msra.mxu0 0.0
  %218 = vmatpush.msra.mxu0 0.0
  %219 = vmatpush.msra.mxu0 0.0
  %220 = vmatpush.msra.mxu0 0.0
  %221 = vmatpush.msra.mxu0 0.0
  %222 = vmatpush.msra.mxu0 0.0
  %223 = vmatpush.msra.mxu0 0.0
  %224 = vmatpush.msra.mxu0 %v31
  %225 = vmatpush.msra.mxu0 %v198
  %226 = vmatpush.msra.mxu0 %v201
  %227 = vmatmul.f32.gmra.mxu0 %v206
  %v228 = vpop.f32.mrf.mxu0
  %v229 = vadd.f32 0.0, %v228
  %230 = vmatmul.f32.gmra.mxu0 %v209
  %v231 = vpop.f32.mrf.mxu0
  %v232 = vadd.f32 0.0, %v231
  %233 = vdwg.mxu0
  %v234 = vtanh.pop %v232
  %v235 = vxor.u32 %v229, 2147483648
  %v236 = vmul.f32 %v235, 1.442695
  %v237 = vpow.pop %v236
  %v238 = vadd.f32 %v237, 1.0
  %v239 = vrcp.pop %v238
  %v240 = vmul.f32 %v238, %v239
  %v241 = vsub.f32 1.0, %v240
  %v242 = vmul.f32 %v239, %v241
  %v243 = vadd.f32 %v239, %v242
  %vm244 = vweird.f32 %v238
  %vm245 = vweird.f32 %v239
  %vm246 = vmor %vm244, %vm245
  %v247 = vsel %vm246, %v239, %v243
  %v248 = vand.u32 2147483647, %v238
  %vm249 = vcmp.eq.f32.partialorder %v248, 8.507059e+37
  %v250 = vand.u32 %v238, 2147483648
  %v251 = vor.u32 1.1754944e-38, %v250
  %v252 = vsel %vm249, %v251, %v247
  %v253 = vmul.f32 1.0, %v252
  %v254 = vmul.f32 %v234, %v253
  %s255 = scalar_lea.vmem %s2, 32
  %v256 = vld [vmem:[%s255] sm:$0xff]
  %v257 = vld [vmem:[%s255 + $0x8] sm:$0x1]
  %v259 = vsel %vm79, %v256, 0
  %v262 = vsel %vm79, %v257, 0
  %264 = vmatpush.msra.mxu0 0.0
  %265 = vmatpush.msra.mxu0 0.0
  %266 = vmatpush.msra.mxu0 0.0
  %267 = vmatpush.msra.mxu0 0.0
  %268 = vmatpush.msra.mxu0 0.0
  %269 = vmatpush.msra.mxu0 0.0
  %270 = vmatpush.msra.mxu0 0.0
  %271 = vmatpush.msra.mxu0 0.0
  %272 = vmatpush.msra.mxu0 0.0
  %273 = vmatpush.msra.mxu0 0.0
  %274 = vmatpush.msra.mxu0 0.0
  %275 = vmatpush.msra.mxu0 0.0
  %276 = vmatpush.msra.mxu0 0.0
  %277 = vmatpush.msra.mxu0 0.0
  %278 = vmatpush.msra.mxu0 %v31
  %279 = vmatpush.msra.mxu0 %v254
  %280 = vmatmul.f32.gmra.mxu0 %v259
  %v281 = vpop.f32.mrf.mxu0
  %v282 = vadd.f32 0.0, %v281
  %283 = vmatmul.f32.gmra.mxu0 %v262
  %v284 = vpop.f32.mrf.mxu0
  %v285 = vadd.f32 0.0, %v284
  %286 = vdwg.mxu0
  %v287 = vadd.f32 %v282, %v198
  %v288 = vadd.f32 %v199, %v285
  %289 = vrot.lane.b32.xlu0 %v287, 1
  %v290 = vpop.permute.xlu0 %289
  %s291 = scalar_lea.vmem %s1, 48
  %v292 = vld [vmem:[%s291] sm:$0xff]
  %v293 = vld [vmem:[%s291 + $0x8] sm:$0xff]
  %v295 = vsel %vm22, %v292, 0
  %v298 = vsel %vm22, %v293, 0
  %300 = vmatpush.msra.mxu0 0.0
  %301 = vmatpush.msra.mxu0 0.0
  %302 = vmatpush.msra.mxu0 0.0
  %303 = vmatpush.msra.mxu0 0.0
  %304 = vmatpush.msra.mxu0 0.0
  %305 = vmatpush.msra.mxu0 0.0
  %306 = vmatpush.msra.mxu0 0.0
  %307 = vmatpush.msra.mxu0 0.0
  %308 = vmatpush.msra.mxu0 0.0
  %309 = vmatpush.msra.mxu0 0.0
  %310 = vmatpush.msra.mxu0 0.0
  %311 = vmatpush.msra.mxu0 0.0
  %312 = vmatpush.msra.mxu0 0.0
  %313 = vmatpush.msra.mxu0 %v31
  %314 = vmatpush.msra.mxu0 %v287
  %315 = vmatpush.msra.mxu0 %v290
  %316 = vmatmul.f32.gmra.mxu0 %v295
  %v317 = vpop.f32.mrf.mxu0
  %v318 = vadd.f32 0.0, %v317
  %319 = vmatmul.f32.gmra.mxu0 %v298
  %v320 = vpop.f32.mrf.mxu0
  %v321 = vadd.f32 0.0, %v320
  %322 = vdwg.mxu0
  %v323 = vtanh.pop %v321
  %v324 = vxor.u32 %v318, 2147483648
  %v325 = vmul.f32 %v324, 1.442695
  %v326 = vpow.pop %v325
  %v327 = vadd.f32 %v326, 1.0
  %v328 = vrcp.pop %v327
  %v329 = vmul.f32 %v327, %v328
  %v330 = vsub.f32 1.0, %v329
  %v331 = vmul.f32 %v328, %v330
  %v332 = vadd.f32 %v328, %v331
  %vm333 = vweird.f32 %v327
  %vm334 = vweird.f32 %v328
  %vm335 = vmor %vm333, %vm334
  %v336 = vsel %vm335, %v328, %v332
  %v337 = vand.u32 2147483647, %v327
  %vm338 = vcmp.eq.f32.partialorder %v337, 8.507059e+37
  %v339 = vand.u32 %v327, 2147483648
  %v340 = vor.u32 1.1754944e-38, %v339
  %v341 = vsel %vm338, %v340, %v336
  %v342 = vmul.f32 1.0, %v341
  %v343 = vmul.f32 %v323, %v342
  %s344 = scalar_lea.vmem %s2, 48
  %v345 = vld [vmem:[%s344] sm:$0xff]
  %v346 = vld [vmem:[%s344 + $0x8] sm:$0x1]
  %v348 = vsel %vm79, %v345, 0
  %v351 = vsel %vm79, %v346, 0
  %353 = vmatpush.msra.mxu0 0.0
  %354 = vmatpush.msra.mxu0 0.0
  %355 = vmatpush.msra.mxu0 0.0
  %356 = vmatpush.msra.mxu0 0.0
  %357 = vmatpush.msra.mxu0 0.0
  %358 = vmatpush.msra.mxu0 0.0
  %359 = vmatpush.msra.mxu0 0.0
  %360 = vmatpush.msra.mxu0 0.0
  %361 = vmatpush.msra.mxu0 0.0
  %362 = vmatpush.msra.mxu0 0.0
  %363 = vmatpush.msra.mxu0 0.0
  %364 = vmatpush.msra.mxu0 0.0
  %365 = vmatpush.msra.mxu0 0.0
  %366 = vmatpush.msra.mxu0 0.0
  %367 = vmatpush.msra.mxu0 %v31
  %368 = vmatpush.msra.mxu0 %v343
  %369 = vmatmul.f32.gmra.mxu0 %v348
  %v370 = vpop.f32.mrf.mxu0
  %v371 = vadd.f32 0.0, %v370
  %372 = vmatmul.f32.gmra.mxu0 %v351
  %v373 = vpop.f32.mrf.mxu0
  %v374 = vadd.f32 0.0, %v373
  %375 = vdwg.mxu0
  %v376 = vadd.f32 %v371, %v287
  %v377 = vadd.f32 %v288, %v374
  %378 = vrot.lane.b32.xlu0 %v376, 2
  %v379 = vpop.permute.xlu0 %378
  %s380 = scalar_lea.vmem %s1, 64
  %v381 = vld [vmem:[%s380] sm:$0xff]
  %v382 = vld [vmem:[%s380 + $0x8] sm:$0xff]
  %v384 = vsel %vm22, %v381, 0
  %v387 = vsel %vm22, %v382, 0
  %389 = vmatpush.msra.mxu0 0.0
  %390 = vmatpush.msra.mxu0 0.0
  %391 = vmatpush.msra.mxu0 0.0
  %392 = vmatpush.msra.mxu0 0.0
  %393 = vmatpush.msra.mxu0 0.0
  %394 = vmatpush.msra.mxu0 0.0
  %395 = vmatpush.msra.mxu0 0.0
  %396 = vmatpush.msra.mxu0 0.0
  %397 = vmatpush.msra.mxu0 0.0
  %398 = vmatpush.msra.mxu0 0.0
  %399 = vmatpush.msra.mxu0 0.0
  %400 = vmatpush.msra.mxu0 0.0
  %401 = vmatpush.msra.mxu0 0.0
  %402 = vmatpush.msra.mxu0 %v31
  %403 = vmatpush.msra.mxu0 %v376
  %404 = vmatpush.msra.mxu0 %v379
  %405 = vmatmul.f32.gmra.mxu0 %v384
  %v406 = vpop.f32.mrf.mxu0
  %v407 = vadd.f32 0.0, %v406
  %408 = vmatmul.f32.gmra.mxu0 %v387
  %v409 = vpop.f32.mrf.mxu0
  %v410 = vadd.f32 0.0, %v409
  %411 = vdwg.mxu0
  %v412 = vtanh.pop %v410
  %v413 = vxor.u32 %v407, 2147483648
  %v414 = vmul.f32 %v413, 1.442695
  %v415 = vpow.pop %v414
  %v416 = vadd.f32 %v415, 1.0
  %v417 = vrcp.pop %v416
  %v418 = vmul.f32 %v416, %v417
  %v419 = vsub.f32 1.0, %v418
  %v420 = vmul.f32 %v417, %v419
  %v421 = vadd.f32 %v417, %v420
  %vm422 = vweird.f32 %v416
  %vm423 = vweird.f32 %v417
  %vm424 = vmor %vm422, %vm423
  %v425 = vsel %vm424, %v417, %v421
  %v426 = vand.u32 2147483647, %v416
  %vm427 = vcmp.eq.f32.partialorder %v426, 8.507059e+37
  %v428 = vand.u32 %v416, 2147483648
  %v429 = vor.u32 1.1754944e-38, %v428
  %v430 = vsel %vm427, %v429, %v425
  %v431 = vmul.f32 1.0, %v430
  %v432 = vmul.f32 %v412, %v431
  %s433 = scalar_lea.vmem %s2, 64
  %v434 = vld [vmem:[%s433] sm:$0xff]
  %v435 = vld [vmem:[%s433 + $0x8] sm:$0x1]
  %v437 = vsel %vm79, %v434, 0
  %v440 = vsel %vm79, %v435, 0
  %442 = vmatpush.msra.mxu0 0.0
  %443 = vmatpush.msra.mxu0 0.0
  %444 = vmatpush.msra.mxu0 0.0
  %445 = vmatpush.msra.mxu0 0.0
  %446 = vmatpush.msra.mxu0 0.0
  %447 = vmatpush.msra.mxu0 0.0
  %448 = vmatpush.msra.mxu0 0.0
  %449 = vmatpush.msra.mxu0 0.0
  %450 = vmatpush.msra.mxu0 0.0
  %451 = vmatpush.msra.mxu0 0.0
  %452 = vmatpush.msra.mxu0 0.0
  %453 = vmatpush.msra.mxu0 0.0
  %454 = vmatpush.msra.mxu0 0.0
  %455 = vmatpush.msra.mxu0 0.0
  %456 = vmatpush.msra.mxu0 %v31
  %457 = vmatpush.msra.mxu0 %v432
  %458 = vmatmul.f32.gmra.mxu0 %v437
  %v459 = vpop.f32.mrf.mxu0
  %v460 = vadd.f32 0.0, %v459
  %461 = vmatmul.f32.gmra.mxu0 %v440
  %v462 = vpop.f32.mrf.mxu0
  %v463 = vadd.f32 0.0, %v462
  %464 = vdwg.mxu0
  %v465 = vadd.f32 %v460, %v376
  %v466 = vadd.f32 %v377, %v463
  %467 = vrot.lane.b32.xlu0 %v465, 4
  %v468 = vpop.permute.xlu0 %467
  %s469 = scalar_lea.vmem %s1, 80
  %v470 = vld [vmem:[%s469] sm:$0xff]
  %v471 = vld [vmem:[%s469 + $0x8] sm:$0xff]
  %v473 = vsel %vm22, %v470, 0
  %v476 = vsel %vm22, %v471, 0
  %478 = vmatpush.msra.mxu0 0.0
  %479 = vmatpush.msra.mxu0 0.0
  %480 = vmatpush.msra.mxu0 0.0
  %481 = vmatpush.msra.mxu0 0.0
  %482 = vmatpush.msra.mxu0 0.0
  %483 = vmatpush.msra.mxu0 0.0
  %484 = vmatpush.msra.mxu0 0.0
  %485 = vmatpush.msra.mxu0 0.0
  %486 = vmatpush.msra.mxu0 0.0
  %487 = vmatpush.msra.mxu0 0.0
  %488 = vmatpush.msra.mxu0 0.0
  %489 = vmatpush.msra.mxu0 0.0
  %490 = vmatpush.msra.mxu0 0.0
  %491 = vmatpush.msra.mxu0 %v31
  %492 = vmatpush.msra.mxu0 %v465
  %493 = vmatpush.msra.mxu0 %v468
  %494 = vmatmul.f32.gmra.mxu0 %v473
  %v495 = vpop.f32.mrf.mxu0
  %v496 = vadd.f32 0.0, %v495
  %497 = vmatmul.f32.gmra.mxu0 %v476
  %v498 = vpop.f32.mrf.mxu0
  %v499 = vadd.f32 0.0, %v498
  %500 = vdwg.mxu0
  %v501 = vtanh.pop %v499
  %v502 = vxor.u32 %v496, 2147483648
  %v503 = vmul.f32 %v502, 1.442695
  %v504 = vpow.pop %v503
  %v505 = vadd.f32 %v504, 1.0
  %v506 = vrcp.pop %v505
  %v507 = vmul.f32 %v505, %v506
  %v508 = vsub.f32 1.0, %v507
  %v509 = vmul.f32 %v506, %v508
  %v510 = vadd.f32 %v506, %v509
  %vm511 = vweird.f32 %v505
  %vm512 = vweird.f32 %v506
  %vm513 = vmor %vm511, %vm512
  %v514 = vsel %vm513, %v506, %v510
  %v515 = vand.u32 2147483647, %v505
  %vm516 = vcmp.eq.f32.partialorder %v515, 8.507059e+37
  %v517 = vand.u32 %v505, 2147483648
  %v518 = vor.u32 1.1754944e-38, %v517
  %v519 = vsel %vm516, %v518, %v514
  %v520 = vmul.f32 1.0, %v519
  %v521 = vmul.f32 %v501, %v520
  %s522 = scalar_lea.vmem %s2, 80
  %v523 = vld [vmem:[%s522] sm:$0xff]
  %v524 = vld [vmem:[%s522 + $0x8] sm:$0x1]
  %v526 = vsel %vm79, %v523, 0
  %v529 = vsel %vm79, %v524, 0
  %531 = vmatpush.msra.mxu0 0.0
  %532 = vmatpush.msra.mxu0 0.0
  %533 = vmatpush.msra.mxu0 0.0
  %534 = vmatpush.msra.mxu0 0.0
  %535 = vmatpush.msra.mxu0 0.0
  %536 = vmatpush.msra.mxu0 0.0
  %537 = vmatpush.msra.mxu0 0.0
  %538 = vmatpush.msra.mxu0 0.0
  %539 = vmatpush.msra.mxu0 0.0
  %540 = vmatpush.msra.mxu0 0.0
  %541 = vmatpush.msra.mxu0 0.0
  %542 = vmatpush.msra.mxu0 0.0
  %543 = vmatpush.msra.mxu0 0.0
  %544 = vmatpush.msra.mxu0 0.0
  %545 = vmatpush.msra.mxu0 %v31
  %546 = vmatpush.msra.mxu0 %v521
  %547 = vmatmul.f32.gmra.mxu0 %v526
  %v548 = vpop.f32.mrf.mxu0
  %549 = vmatmul.f32.gmra.mxu0 %v529
  %v550 = vpop.f32.mrf.mxu0
  %v551 = vadd.f32 0.0, %v550
  %552 = vdwg.mxu0
  %v553 = vadd.f32 %v466, %v551
  %554 = vst [vmem:[%s3] sm:$0x1] %v553
  // Predicated region
  $region14: #{wavenet_forward.1} parent=0 // pred_check
    _
  $region15: #{wavenet_forward.1} parent=0 // pred_check_branch
    %556 = sbr.rel (0) target = $region17
  $region16: #{wavenet_forward.1} parent=0 // pred_region
    _
  $region17: #{wavenet_forward.1} parent=0 // pred_fallthru
    _
  // Predicated region
  $region18: #{wavenet_forward.1} parent=0 // pred_check
    _
  $region19: #{wavenet_forward.1} parent=0 // pred_check_branch
    %558 = sbr.rel (0) target = $region21
  $region20: #{wavenet_forward.1} parent=0 // pred_region
    _
  $region21: #{wavenet_forward.1} parent=0 // pred_fallthru
    _

</llo_original>
